<compile_context>
chip_gen: v7x
topology: tpu7x:2x2x1
jax: 0.10.0
libtpu: 0.0.40
codegen_flags: <defaults>
</compile_context>

<pallas_src>
import functools
import math

import jax
import jax.numpy as jnp
from jax import lax
from jax.experimental import pallas as pl
from jax.experimental.pallas import tpu as pltpu

LRELU_SLOPE = 0.2
IN_EPS = 1e-5                      # nn.InstanceNorm1d default eps
INV_SQRT2 = 1.0 / math.sqrt(2.0)
_HALO = 128                        # width of the halo-carrier blocks (one vreg lane group)


# ----------------------------------------------------------------------------
# Small helpers
# ----------------------------------------------------------------------------
def _round_up(v, m):
    return ((v + m - 1) // m) * m


def _vmem_capacity_bytes():
    try:
        return int(pltpu.get_tpu_info().vmem_capacity_bytes)
    except Exception:
        return 128 * 1024 * 1024   # v5e/v6e default; v7x reports its own 64 MiB


def _pick_t_tile(T, c_in_p, c_out_p, itemsize, vmem_cap):
    # ~55% of physical VMEM for the double-buffered tiles + live f32
    # temporaries of the heavier stage-2 step; leaves headroom for compiler
    # scratch (review: ~48 MiB usable budget on v7x, ~96 MiB on v5e/v6e).
    budget = int(0.55 * vmem_cap)
    per_col = (2 * itemsize * (2 * c_out_p + c_in_p)      # pipelined h1/x/out blocks
               + 4 * (5 * c_out_p + c_in_p))              # live f32 temporaries
    cols = max(128, budget // max(per_col, 1))
    t_tile = (cols // 128) * 128
    t_cap = _round_up(max(T, 1), 128)
    return int(max(128, min(t_tile, t_cap, 16 * 1024)))


# ----------------------------------------------------------------------------
# Pallas kernel: one (batch, T-tile) step of
#   AdaIN affine -> LeakyReLU -> k=3 'same' conv [+ shortcut, * 1/sqrt(2)]
# ----------------------------------------------------------------------------
def _conv_stage_kernel(*refs, c_mid, t_tile, t_valid, add_shortcut,
                       learned_sc, out_scale, mxu_dtype):
    if add_shortcut:
        (ss_ref, y_ref, yl_ref, yr_ref, w_ref, b_ref,
         x_ref, wsc_ref, o_ref) = refs
    else:
        ss_ref, y_ref, yl_ref, yr_ref, w_ref, b_ref, o_ref = refs
        x_ref = wsc_ref = None

    j = pl.program_id(1)

    # Masks hoisted once and reused (review: no per-call iota/compare re-emit).
    lcol = lax.broadcasted_iota(jnp.int32, (1, t_tile), 1)
    gcol = lcol + j * t_tile                 # global column index
    mask_m1 = gcol >= 1                      # conv left zero-padding
    mask_p1 = gcol < (t_valid - 1)           # conv right zero-padding (true T)

    ss = ss_ref[0].astype(jnp.float32)       # (2*c_mid, 1): [scale; shift]
    scale = ss[:c_mid]
    shift = ss[c_mid:]

    def act(v):                              # AdaIN affine + LeakyReLU, f32 math
        h = v.astype(jnp.float32) * scale + shift
        return jnp.where(h > 0, h, LRELU_SLOPE * h).astype(mxu_dtype)

    a = act(y_ref[0])                                # (c_mid, t_tile)
    a_m1 = act(yl_ref[0][:, _HALO - 1:_HALO])        # halo column  j*t_tile - 1
    a_p1 = act(yr_ref[0][:, 0:1])                    # halo column (j+1)*t_tile

    # matmul-then-shift: one MXU pass per tap (same flops as im2col, no (3C,T)
    # concat temporary), halo column patched in via a 1-column lane concat.
    p_mid = jnp.dot(w_ref[1], a, preferred_element_type=jnp.float32)
    p_m1 = jnp.dot(w_ref[0], a, preferred_element_type=jnp.float32)
    p_p1 = jnp.dot(w_ref[2], a, preferred_element_type=jnp.float32)
    h_m1 = jnp.dot(w_ref[0], a_m1, preferred_element_type=jnp.float32)
    h_p1 = jnp.dot(w_ref[2], a_p1, preferred_element_type=jnp.float32)

    left = jnp.concatenate([h_m1, p_m1[:, :t_tile - 1]], axis=1)    # y[t-1] tap
    right = jnp.concatenate([p_p1[:, 1:], h_p1], axis=1)            # y[t+1] tap
    conv = (p_mid
            + jnp.where(mask_m1, left, 0.0)
            + jnp.where(mask_p1, right, 0.0)
            + b_ref[...])

    if add_shortcut:
        if learned_sc:
            sc = jnp.dot(wsc_ref[...], x_ref[0].astype(mxu_dtype),
                         preferred_element_type=jnp.float32)
        else:
            sc = x_ref[0].astype(jnp.float32)
        out = (conv + sc) * out_scale
        # Single store (review item); padded lanes zeroed so they cannot leak.
        o_ref[0] = jnp.where(gcol < t_valid, out, 0.0).astype(o_ref.dtype)
    else:
        # Intermediate activation: padded lanes are don't-care (stage-2 stats
        # are taken on the [:T] slice, its conv masks ignore them). One store.
        o_ref[0] = conv.astype(o_ref.dtype)


# ----------------------------------------------------------------------------
# Wrapper: XLA-side stats / fc hoist, weight packing, two T-tiled pallas_calls
# ----------------------------------------------------------------------------
def ada_in_res_block_1d(x, s, params, *, dim_in, dim_out,
                        mxu_dtype=None, t_tile=None):
    """Forward pass of AdaINResBlock1D (upsample=None, eval mode)."""
    B, C_in, T = x.shape
    assert C_in == dim_in
    learned_sc = dim_in != dim_out
    f32 = jnp.float32
    if mxu_dtype is None:
        # review: bf16 MXU operands (f32 accumulation) on bf16-native MXUs.
        mxu_dtype = jnp.bfloat16 if x.dtype == jnp.float32 else x.dtype

    c_in_p = _round_up(dim_in, 8)            # sublane-friendly channel padding
    c_out_p = _round_up(dim_out, 8)

    # ---- XLA-side prologue: style fc + AdaIN-1 stats (centered, two-pass).
    x32 = x.astype(f32)
    mean1 = jnp.mean(x32, axis=2)
    var1 = jnp.mean(jnp.square(x32 - mean1[..., None]), axis=2)
    hfc1 = s.astype(f32) @ params["fc1_w"].astype(f32).T + params["fc1_b"].astype(f32)
    scale1 = (1.0 + hfc1[:, :dim_in]) * lax.rsqrt(var1 + IN_EPS)
    shift1 = hfc1[:, dim_in:] - scale1 * mean1

    # ---- T tiling: generation-aware VMEM budget -> tile size / vmem limit.
    vmem_cap = _vmem_capacity_bytes()
    if t_tile is None:
        t_tile = _pick_t_tile(T, c_in_p, c_out_p, x.dtype.itemsize, vmem_cap)
    t_tile = max(128, _round_up(min(int(t_tile), _round_up(T, 128)), 128))
    T_pad = _round_up(T, t_tile)
    nT = T_pad // t_tile
    r = t_tile // _HALO
    n_halo = T_pad // _HALO
    vmem_limit = int(0.75 * vmem_cap)

    x_p = jnp.pad(x, ((0, 0), (0, c_in_p - dim_in), (0, T_pad - T)))

    # ---- parameter packing (weight_norm already folded in `params`).
    def pack_ss(scale, shift, cp):
        c = scale.shape[1]
        sc = jnp.pad(scale, ((0, 0), (0, cp - c)))
        sh = jnp.pad(shift, ((0, 0), (0, cp - c)))
        return jnp.concatenate([sc, sh], axis=1)[:, :, None].astype(f32)

    def pack_w(w, cop, cip):
        co, ci, _ = w.shape
        w3 = jnp.moveaxis(w.astype(f32), 2, 0)            # (3, co, ci): tap-major
        w3 = jnp.pad(w3, ((0, 0), (0, cop - co), (0, cip - ci)))
        return w3.astype(mxu_dtype)

    def pack_b(b, cop):
        return jnp.pad(b.astype(f32), (0, cop - b.shape[0])).reshape(cop, 1)

    ss1 = pack_ss(scale1, shift1, c_in_p)
    w1 = pack_w(params["conv1_w"], c_out_p, c_in_p)
    cb1 = pack_b(params["conv1_b"], c_out_p)
    w2 = pack_w(params["conv2_w"], c_out_p, c_out_p)
    cb2 = pack_b(params["conv2_b"], c_out_p)
    if learned_sc:
        wsc = jnp.pad(params["conv1x1_w"][:, :, 0].astype(f32),
                      ((0, c_out_p - dim_out), (0, c_in_p - dim_in))).astype(mxu_dtype)
    else:
        wsc = jnp.zeros((8, 128), mxu_dtype)              # unused dummy

    # ---- BlockSpecs (grid = (B, nT); all blocks independent -> both parallel).
    def ss_spec(cp):
        return pl.BlockSpec((1, 2 * cp, 1), lambda b, j: (b, 0, 0))

    def tile_spec(cp):
        return pl.BlockSpec((1, cp, t_tile), lambda b, j: (b, 0, j))

    def lhalo_spec(cp):    # 128-wide block whose LAST lane is column j*t_tile - 1
        return pl.BlockSpec((1, cp, _HALO),
                            lambda b, j: (b, 0, jnp.maximum(j * r - 1, 0)))

    def rhalo_spec(cp):    # 128-wide block whose FIRST lane is column (j+1)*t_tile
        return pl.BlockSpec((1, cp, _HALO),
                            lambda b, j: (b, 0, jnp.minimum((j + 1) * r, n_halo - 1)))

    def const_spec(arr):
        if arr.ndim == 2:
            return pl.BlockSpec(arr.shape, lambda b, j: (0, 0))
        return pl.BlockSpec(arr.shape, lambda b, j: (0, 0, 0))

    def out_spec():
        return pl.BlockSpec((1, c_out_p, t_tile), lambda b, j: (b, 0, j))

    cparams = pltpu.CompilerParams(
        dimension_semantics=("parallel", "parallel"),
        vmem_limit_bytes=vmem_limit)
    grid = (B, nT)

    # ---- stage 1: h1 = conv1(lrelu(adain1(x)))
    k1 = functools.partial(
        _conv_stage_kernel, c_mid=c_in_p, t_tile=t_tile, t_valid=T,
        add_shortcut=False, learned_sc=False, out_scale=1.0, mxu_dtype=mxu_dtype)
    h1 = pl.pallas_call(
        k1, grid=grid,
        in_specs=[ss_spec(c_in_p), tile_spec(c_in_p), lhalo_spec(c_in_p),
                  rhalo_spec(c_in_p), const_spec(w1), const_spec(cb1)],
        out_specs=out_spec(),
        out_shape=jax.ShapeDtypeStruct((B, c_out_p, T_pad), x.dtype),
        compiler_params=cparams,
    )(ss1, x_p, x_p, x_p, w1, cb1)

    # ---- XLA-side AdaIN-2 statistics over the valid region (two-pass, centered).
    h1v = h1[:, :dim_out, :T].astype(f32)
    mean2 = jnp.mean(h1v, axis=2)
    var2 = jnp.mean(jnp.square(h1v - mean2[..., None]), axis=2)
    hfc2 = s.astype(f32) @ params["fc2_w"].astype(f32).T + params["fc2_b"].astype(f32)
    scale2 = (1.0 + hfc2[:, :dim_out]) * lax.rsqrt(var2 + IN_EPS)
    shift2 = hfc2[:, dim_out:] - scale2 * mean2
    ss2 = pack_ss(scale2, shift2, c_out_p)

    # ---- stage 2: out = (conv2(lrelu(adain2(h1))) + shortcut(x)) / sqrt(2)
    k2 = functools.partial(
        _conv_stage_kernel, c_mid=c_out_p, t_tile=t_tile, t_valid=T,
        add_shortcut=True, learned_sc=learned_sc, out_scale=INV_SQRT2,
        mxu_dtype=mxu_dtype)
    out = pl.pallas_call(
        k2, grid=grid,
        in_specs=[ss_spec(c_out_p), tile_spec(c_out_p), lhalo_spec(c_out_p),
                  rhalo_spec(c_out_p), const_spec(w2), const_spec(cb2),
                  tile_spec(c_in_p), const_spec(wsc)],
        out_specs=out_spec(),
        out_shape=jax.ShapeDtypeStruct((B, c_out_p, T_pad), x.dtype),
        compiler_params=cparams,
    )(ss2, h1, h1, h1, w2, cb2, x_p, wsc)

    return out[:, :dim_out, :T]


# ----------------------------------------------------------------------------
# Deterministic parameter init (weight_norm folded: w = g * v / ||v||).
# ----------------------------------------------------------------------------
def _wn(v, g):
    norm = jnp.sqrt(jnp.sum(v * v, axis=tuple(range(1, v.ndim)), keepdims=True))
    return (g.reshape((-1,) + (1,) * (v.ndim - 1)) * v / norm).astype(jnp.float32)


def make_params(key, dim_in, dim_out, style_dim):
    ks = jax.random.split(key, 10)
    n = lambda k, shp, sc=0.1: (sc * jax.random.normal(k, shp, jnp.float32))
    v1 = n(ks[0], (dim_out, dim_in, 3)); g1 = 1.0 + n(ks[1], (dim_out,))
    v2 = n(ks[2], (dim_out, dim_out, 3)); g2 = 1.0 + n(ks[3], (dim_out,))
    vsc = n(ks[4], (dim_out, dim_in, 1)); gsc = 1.0 + n(ks[5], (dim_out,))
    return {
        "fc1_w": n(ks[6], (2 * dim_in, style_dim), 0.2),
        "fc1_b": n(ks[7], (2 * dim_in,), 0.2),
        "fc2_w": n(ks[8], (2 * dim_out, style_dim), 0.2),
        "fc2_b": n(ks[9], (2 * dim_out,), 0.2),
        "conv1_w": _wn(v1, g1), "conv1_b": n(ks[1], (dim_out,)),
        "conv2_w": _wn(v2, g2), "conv2_b": n(ks[3], (dim_out,)),
        "conv1x1_w": _wn(vsc, gsc),
    }


# ----------------------------------------------------------------------------
# Pure-JAX reference (mirrors the PyTorch forward) for verification.
# ----------------------------------------------------------------------------
def reference(x, s, p, dim_in, dim_out):
    def adain(y, w, b, c):
        h = s @ w.T + b
        gamma, beta = h[:, :c, None], h[:, c:, None]
        mean = jnp.mean(y, axis=-1, keepdims=True)
        var = jnp.mean((y - mean) ** 2, axis=-1, keepdims=True)
        return (1 + gamma) * (y - mean) / jnp.sqrt(var + IN_EPS) + beta

    def conv(y, w, b):
        out = lax.conv_general_dilated(y, w, (1,), ((1, 1),),
                                       dimension_numbers=("NCH", "OIH", "NCH"))
        return out + b[None, :, None]

    lrelu = lambda y: jnp.where(y > 0, y, LRELU_SLOPE * y)
    h = adain(x, p["fc1_w"], p["fc1_b"], dim_in)
    h = conv(lrelu(h), p["conv1_w"], p["conv1_b"])
    h = adain(h, p["fc2_w"], p["fc2_b"], dim_out)
    h = conv(lrelu(h), p["conv2_w"], p["conv2_b"])
    sc = jnp.einsum("oi,bit->bot", p["conv1x1_w"][:, :, 0], x) \
        if dim_in != dim_out else x
    return (h + sc) / math.sqrt(2.0)


if __name__ == "__main__":
    key = jax.random.PRNGKey(0)

    # Case 1: learned shortcut, T not a multiple of 128, single T tile.
    #         f32 MXU operands for a strict check of the algorithm.
    B, dim_in, dim_out, style_dim, T = 2, 4, 8, 16, 100
    kx, ks_, kp = jax.random.split(key, 3)
    x = jax.random.normal(kx, (B, dim_in, T), jnp.float32)
    s = jax.random.normal(ks_, (B, style_dim), jnp.float32)
    params = make_params(kp, dim_in, dim_out, style_dim)
    ref = reference(x, s, params, dim_in, dim_out)
    out = jax.block_until_ready(
        ada_in_res_block_1d(x, s, params, dim_in=dim_in, dim_out=dim_out,
                            mxu_dtype=jnp.float32))
    assert out.shape == (B, dim_out, T)
    assert jnp.allclose(out, ref, atol=2e-3, rtol=2e-3), \
        f"case1 max err {jnp.max(jnp.abs(out - ref))}"

    # Case 2: identity shortcut (dim_in == dim_out), lane-aligned T.
    B2, d2, style2, T2 = 2, 8, 16, 128
    kx2, ks2, kp2 = jax.random.split(jax.random.PRNGKey(1), 3)
    x2 = jax.random.normal(kx2, (B2, d2, T2), jnp.float32)
    s2 = jax.random.normal(ks2, (B2, style2), jnp.float32)
    p2 = make_params(kp2, d2, d2, style2)
    ref2 = reference(x2, s2, p2, d2, d2)
    out2 = jax.block_until_ready(
        ada_in_res_block_1d(x2, s2, p2, dim_in=d2, dim_out=d2,
                            mxu_dtype=jnp.float32))
    assert out2.shape == (B2, d2, T2)
    assert jnp.allclose(out2, ref2, atol=2e-3, rtol=2e-3), \
        f"case2 max err {jnp.max(jnp.abs(out2 - ref2))}"

    # Case 3: multiple T tiles (halo columns crossing tile boundaries).
    B3, d3i, d3o, st3, T3 = 1, 4, 8, 16, 300
    kx3, ks3, kp3 = jax.random.split(jax.random.PRNGKey(2), 3)
    x3 = jax.random.normal(kx3, (B3, d3i, T3), jnp.float32)
    s3 = jax.random.normal(ks3, (B3, st3), jnp.float32)
    p3 = make_params(kp3, d3i, d3o, st3)
    ref3 = reference(x3, s3, p3, d3i, d3o)
    out3 = jax.block_until_ready(
        ada_in_res_block_1d(x3, s3, p3, dim_in=d3i, dim_out=d3o,
                            mxu_dtype=jnp.float32, t_tile=128))
    assert out3.shape == (B3, d3o, T3)
    assert jnp.allclose(out3, ref3, atol=2e-3, rtol=2e-3), \
        f"case3 max err {jnp.max(jnp.abs(out3 - ref3))}"

    # Case 4: default bf16 MXU operands (v6e/v7x fast path). Exact math was
    # verified above; this is a loose sanity bound for the low-precision path.
    out4 = jax.block_until_ready(
        ada_in_res_block_1d(x, s, params, dim_in=dim_in, dim_out=dim_out))
    err = jnp.abs(out4.astype(jnp.float32) - ref)
    assert bool(jnp.all(jnp.isfinite(out4)))
    assert float(jnp.max(err)) < 0.5 and float(jnp.mean(err)) < 0.05, \
        f"case4 (bf16) max={float(jnp.max(err)):.3f} mean={float(jnp.mean(err)):.4f}"

    print("KERNEL_OK")
</pallas_src>

<mosaic_0001>
module attributes {stable_mosaic.version = 11 : i64} {
  func.func @_conv_stage_kernel(%arg0: i32, %arg1: i32, %arg2: memref<1x16x1xf32, #tpu.memory_space<vmem>>, %arg3: memref<1x8x128xf32, #tpu.memory_space<vmem>>, %arg4: memref<1x8x128xf32, #tpu.memory_space<vmem>>, %arg5: memref<1x8x128xf32, #tpu.memory_space<vmem>>, %arg6: memref<3x8x8xf32, #tpu.memory_space<vmem>>, %arg7: memref<8x1xf32, #tpu.memory_space<vmem>>, %arg8: memref<1x8x128xf32, #tpu.memory_space<vmem>>) attributes {dimension_semantics = [#tpu.dimension_semantics<parallel>, #tpu.dimension_semantics<parallel>], iteration_bounds = array<i64: 2, 1>, scalar_prefetch = 0 : i64, scratch_operands = 0 : i64, tpu.core_type = #tpu.core_type<tc>, window_params = [{transform_indices = @transform_0, window_bounds = array<i64: 1, 16, 1>}, {transform_indices = @transform_1, window_bounds = array<i64: 1, 8, 128>}, {transform_indices = @transform_2, window_bounds = array<i64: 1, 8, 128>}, {transform_indices = @transform_3, window_bounds = array<i64: 1, 8, 128>}, {pipeline_mode = #tpu.pipeline_mode<synchronous>, transform_indices = @transform_4, window_bounds = array<i64: 3, 8, 8>}, {pipeline_mode = #tpu.pipeline_mode<synchronous>, transform_indices = @transform_5, window_bounds = array<i64: 8, 1>}, {transform_indices = @transform_6, window_bounds = array<i64: 1, 8, 128>}]} {
    %0 = tpu.iota {dimensions = array<i32: 1>} : vector<1x128xi32>
    %c128_i32 = arith.constant 128 : i32
    %1 = arith.muli %arg1, %c128_i32 : i32
    %2 = vector.broadcast %1 : i32 to vector<1x128xi32>
    %3 = arith.addi %0, %2 : vector<1x128xi32>
    %c1_i32 = arith.constant 1 : i32
    %4 = vector.broadcast %c1_i32 : i32 to vector<1x128xi32>
    %5 = arith.cmpi sge, %3, %4 : vector<1x128xi32>
    %c99_i32 = arith.constant 99 : i32
    %6 = vector.broadcast %c99_i32 : i32 to vector<1x128xi32>
    %7 = arith.cmpi slt, %3, %6 : vector<1x128xi32>
    %c0 = arith.constant 0 : index
    %c0_0 = arith.constant 0 : index
    %c0_1 = arith.constant 0 : index
    %8 = vector.load %arg2[%c0, %c0_0, %c0_1] : memref<1x16x1xf32, #tpu.memory_space<vmem>>, vector<1x16x1xf32>
    %9 = vector.shape_cast %8 : vector<1x16x1xf32> to vector<16x1xf32>
    %10 = vector.extract_strided_slice %9 {offsets = [0, 0], sizes = [8, 1], strides = [1, 1]} : vector<16x1xf32> to vector<8x1xf32>
    %11 = vector.extract_strided_slice %9 {offsets = [8, 0], sizes = [8, 1], strides = [1, 1]} : vector<16x1xf32> to vector<8x1xf32>
    %c0_2 = arith.constant 0 : index
    %c0_3 = arith.constant 0 : index
    %c0_4 = arith.constant 0 : index
    %12 = vector.load %arg3[%c0_2, %c0_3, %c0_4] : memref<1x8x128xf32, #tpu.memory_space<vmem>>, vector<1x8x128xf32>
    %13 = vector.shape_cast %12 : vector<1x8x128xf32> to vector<8x128xf32>
    %14 = vector.broadcast %10 : vector<8x1xf32> to vector<8x128xf32>
    %15 = arith.mulf %13, %14 : vector<8x128xf32>
    %16 = vector.broadcast %11 : vector<8x1xf32> to vector<8x128xf32>
    %17 = arith.addf %15, %16 : vector<8x128xf32>
    %cst = arith.constant 0.000000e+00 : f32
    %18 = vector.broadcast %cst : f32 to vector<8x128xf32>
    %19 = arith.cmpf ogt, %17, %18 : vector<8x128xf32>
    %cst_5 = arith.constant 2.000000e-01 : f32
    %20 = vector.broadcast %cst_5 : f32 to vector<8x128xf32>
    %21 = arith.mulf %20, %17 : vector<8x128xf32>
    %22 = arith.select %19, %17, %21 : vector<8x128xi1>, vector<8x128xf32>
    %c0_6 = arith.constant 0 : index
    %c0_7 = arith.constant 0 : index
    %c0_8 = arith.constant 0 : index
    %23 = vector.load %arg4[%c0_6, %c0_7, %c0_8] : memref<1x8x128xf32, #tpu.memory_space<vmem>>, vector<1x8x128xf32>
    %24 = vector.shape_cast %23 : vector<1x8x128xf32> to vector<8x128xf32>
    %25 = vector.extract_strided_slice %24 {offsets = [0, 127], sizes = [8, 1], strides = [1, 1]} : vector<8x128xf32> to vector<8x1xf32>
    %26 = arith.mulf %25, %10 : vector<8x1xf32>
    %27 = arith.addf %26, %11 : vector<8x1xf32>
    %cst_9 = arith.constant 0.000000e+00 : f32
    %28 = vector.broadcast %cst_9 : f32 to vector<8x1xf32>
    %29 = arith.cmpf ogt, %27, %28 : vector<8x1xf32>
    %cst_10 = arith.constant 2.000000e-01 : f32
    %30 = vector.broadcast %cst_10 : f32 to vector<8x1xf32>
    %31 = arith.mulf %30, %27 : vector<8x1xf32>
    %32 = arith.select %29, %27, %31 : vector<8x1xi1>, vector<8x1xf32>
    %c0_11 = arith.constant 0 : index
    %c0_12 = arith.constant 0 : index
    %c0_13 = arith.constant 0 : index
    %33 = vector.load %arg5[%c0_11, %c0_12, %c0_13] : memref<1x8x128xf32, #tpu.memory_space<vmem>>, vector<1x8x128xf32>
    %34 = vector.shape_cast %33 : vector<1x8x128xf32> to vector<8x128xf32>
    %35 = vector.extract_strided_slice %34 {offsets = [0, 0], sizes = [8, 1], strides = [1, 1]} : vector<8x128xf32> to vector<8x1xf32>
    %36 = arith.mulf %35, %10 : vector<8x1xf32>
    %37 = arith.addf %36, %11 : vector<8x1xf32>
    %cst_14 = arith.constant 0.000000e+00 : f32
    %38 = vector.broadcast %cst_14 : f32 to vector<8x1xf32>
    %39 = arith.cmpf ogt, %37, %38 : vector<8x1xf32>
    %cst_15 = arith.constant 2.000000e-01 : f32
    %40 = vector.broadcast %cst_15 : f32 to vector<8x1xf32>
    %41 = arith.mulf %40, %37 : vector<8x1xf32>
    %42 = arith.select %39, %37, %41 : vector<8x1xi1>, vector<8x1xf32>
    %c1 = arith.constant 1 : index
    %c0_16 = arith.constant 0 : index
    %c0_17 = arith.constant 0 : index
    %43 = vector.load %arg6[%c1, %c0_16, %c0_17] : memref<3x8x8xf32, #tpu.memory_space<vmem>>, vector<1x8x8xf32>
    %44 = vector.shape_cast %43 : vector<1x8x8xf32> to vector<8x8xf32>
    %cst_18 = arith.constant dense<0.000000e+00> : vector<8x128xf32>
    %45 = tpu.matmul %44, %22, %cst_18 {dimension_numbers = #tpu.dot_dimension_numbers<[1], [0], [0], [1], [0, 0, 1, 1], [], []>} : vector<8x8xf32>, vector<8x128xf32>, vector<8x128xf32> -> vector<8x128xf32>
    %c0_19 = arith.constant 0 : index
    %c0_20 = arith.constant 0 : index
    %c0_21 = arith.constant 0 : index
    %46 = vector.load %arg6[%c0_19, %c0_20, %c0_21] : memref<3x8x8xf32, #tpu.memory_space<vmem>>, vector<1x8x8xf32>
    %47 = vector.shape_cast %46 : vector<1x8x8xf32> to vector<8x8xf32>
    %cst_22 = arith.constant dense<0.000000e+00> : vector<8x128xf32>
    %48 = tpu.matmul %47, %22, %cst_22 {dimension_numbers = #tpu.dot_dimension_numbers<[1], [0], [0], [1], [0, 0, 1, 1], [], []>} : vector<8x8xf32>, vector<8x128xf32>, vector<8x128xf32> -> vector<8x128xf32>
    %c2 = arith.constant 2 : index
    %c0_23 = arith.constant 0 : index
    %c0_24 = arith.constant 0 : index
    %49 = vector.load %arg6[%c2, %c0_23, %c0_24] : memref<3x8x8xf32, #tpu.memory_space<vmem>>, vector<1x8x8xf32>
    %50 = vector.shape_cast %49 : vector<1x8x8xf32> to vector<8x8xf32>
    %cst_25 = arith.constant dense<0.000000e+00> : vector<8x128xf32>
    %51 = tpu.matmul %50, %22, %cst_25 {dimension_numbers = #tpu.dot_dimension_numbers<[1], [0], [0], [1], [0, 0, 1, 1], [], []>} : vector<8x8xf32>, vector<8x128xf32>, vector<8x128xf32> -> vector<8x128xf32>
    %c0_26 = arith.constant 0 : index
    %c0_27 = arith.constant 0 : index
    %c0_28 = arith.constant 0 : index
    %52 = vector.load %arg6[%c0_26, %c0_27, %c0_28] : memref<3x8x8xf32, #tpu.memory_space<vmem>>, vector<1x8x8xf32>
    %53 = vector.shape_cast %52 : vector<1x8x8xf32> to vector<8x8xf32>
    %cst_29 = arith.constant dense<0.000000e+00> : vector<8x1xf32>
    %54 = tpu.matmul %53, %32, %cst_29 {dimension_numbers = #tpu.dot_dimension_numbers<[1], [0], [0], [1], [0, 0, 1, 1], [], []>} : vector<8x8xf32>, vector<8x1xf32>, vector<8x1xf32> -> vector<8x1xf32>
    %c2_30 = arith.constant 2 : index
    %c0_31 = arith.constant 0 : index
    %c0_32 = arith.constant 0 : index
    %55 = vector.load %arg6[%c2_30, %c0_31, %c0_32] : memref<3x8x8xf32, #tpu.memory_space<vmem>>, vector<1x8x8xf32>
    %56 = vector.shape_cast %55 : vector<1x8x8xf32> to vector<8x8xf32>
    %cst_33 = arith.constant dense<0.000000e+00> : vector<8x1xf32>
    %57 = tpu.matmul %56, %42, %cst_33 {dimension_numbers = #tpu.dot_dimension_numbers<[1], [0], [0], [1], [0, 0, 1, 1], [], []>} : vector<8x8xf32>, vector<8x1xf32>, vector<8x1xf32> -> vector<8x1xf32>
    %58 = vector.extract_strided_slice %48 {offsets = [0, 0], sizes = [8, 127], strides = [1, 1]} : vector<8x128xf32> to vector<8x127xf32>
    %59 = tpu.concatenate %54, %58 in 1 : vector<8x1xf32>, vector<8x127xf32> -> vector<8x128xf32>
    %60 = vector.extract_strided_slice %51 {offsets = [0, 1], sizes = [8, 127], strides = [1, 1]} : vector<8x128xf32> to vector<8x127xf32>
    %61 = tpu.concatenate %60, %57 in 1 : vector<8x127xf32>, vector<8x1xf32> -> vector<8x128xf32>
    %cst_34 = arith.constant 0.000000e+00 : f32
    %62 = vector.shape_cast %5 : vector<1x128xi1> to vector<1x128xi1>
    %63 = vector.broadcast %62 : vector<1x128xi1> to vector<8x128xi1>
    %64 = vector.broadcast %cst_34 : f32 to vector<8x128xf32>
    %65 = arith.select %63, %59, %64 : vector<8x128xi1>, vector<8x128xf32>
    %66 = arith.addf %45, %65 : vector<8x128xf32>
    %cst_35 = arith.constant 0.000000e+00 : f32
    %67 = vector.shape_cast %7 : vector<1x128xi1> to vector<1x128xi1>
    %68 = vector.broadcast %67 : vector<1x128xi1> to vector<8x128xi1>
    %69 = vector.broadcast %cst_35 : f32 to vector<8x128xf32>
    %70 = arith.select %68, %61, %69 : vector<8x128xi1>, vector<8x128xf32>
    %71 = arith.addf %66, %70 : vector<8x128xf32>
    %c0_36 = arith.constant 0 : index
    %c0_37 = arith.constant 0 : index
    %72 = vector.load %arg7[%c0_36, %c0_37] : memref<8x1xf32, #tpu.memory_space<vmem>>, vector<8x1xf32>
    %73 = vector.broadcast %72 : vector<8x1xf32> to vector<8x128xf32>
    %74 = arith.addf %71, %73 : vector<8x128xf32>
    %c0_38 = arith.constant 0 : index
    %c0_39 = arith.constant 0 : index
    %c0_40 = arith.constant 0 : index
    %75 = vector.load %arg8[%c0_38, %c0_39, %c0_40] : memref<1x8x128xf32, #tpu.memory_space<vmem>>, vector<1x8x128xf32>
    %76 = vector.shape_cast %75 : vector<1x8x128xf32> to vector<8x128xf32>
    %77 = vector.shape_cast %74 : vector<8x128xf32> to vector<1x8x128xf32>
    tpu.vector_store %arg8[%c0_38, %c0_39, %c0_40], %77 {strides = array<i32>} : memref<1x8x128xf32, #tpu.memory_space<vmem>>, vector<1x8x128xf32>,
    return
  }
  func.func @transform_0(%arg0: i32, %arg1: i32) -> (i32, i32, i32) {
    %c0_i32 = arith.constant 0 : i32
    %c0_i32_0 = arith.constant 0 : i32
    %c0_i32_1 = arith.constant 0 : i32
    return %arg0, %c0_i32, %c0_i32_0 : i32, i32, i32
  }
  func.func @transform_1(%arg0: i32, %arg1: i32) -> (i32, i32, i32) {
    %c0_i32 = arith.constant 0 : i32
    %c0_i32_0 = arith.constant 0 : i32
    return %arg0, %c0_i32, %arg1 : i32, i32, i32
  }
  func.func @transform_2(%arg0: i32, %arg1: i32) -> (i32, i32, i32) {
    %c1_i32 = arith.constant 1 : i32
    %0 = arith.muli %arg1, %c1_i32 : i32
    %c1_i32_0 = arith.constant 1 : i32
    %1 = arith.subi %0, %c1_i32_0 : i32
    %c0_i32 = arith.constant 0 : i32
    %2 = arith.maxsi %1, %c0_i32 : i32
    %c0_i32_1 = arith.constant 0 : i32
    %c0_i32_2 = arith.constant 0 : i32
    return %arg0, %c0_i32_1, %2 : i32, i32, i32
  }
  func.func @transform_3(%arg0: i32, %arg1: i32) -> (i32, i32, i32) {
    %c1_i32 = arith.constant 1 : i32
    %0 = arith.addi %arg1, %c1_i32 : i32
    %c1_i32_0 = arith.constant 1 : i32
    %1 = arith.muli %0, %c1_i32_0 : i32
    %c0_i32 = arith.constant 0 : i32
    %2 = arith.minsi %1, %c0_i32 : i32
    %c0_i32_1 = arith.constant 0 : i32
    %c0_i32_2 = arith.constant 0 : i32
    return %arg0, %c0_i32_1, %2 : i32, i32, i32
  }
  func.func @transform_4(%arg0: i32, %arg1: i32) -> (i32, i32, i32) {
    %c0_i32 = arith.constant 0 : i32
    %c0_i32_0 = arith.constant 0 : i32
    %c0_i32_1 = arith.constant 0 : i32
    %c0_i32_2 = arith.constant 0 : i32
    return %c0_i32, %c0_i32_0, %c0_i32_1 : i32, i32, i32
  }
  func.func @transform_5(%arg0: i32, %arg1: i32) -> (i32, i32) {
    %c0_i32 = arith.constant 0 : i32
    %c0_i32_0 = arith.constant 0 : i32
    %c0_i32_1 = arith.constant 0 : i32
    return %c0_i32, %c0_i32_0 : i32, i32
  }
  func.func @transform_6(%arg0: i32, %arg1: i32) -> (i32, i32, i32) {
    %c0_i32 = arith.constant 0 : i32
    %c0_i32_0 = arith.constant 0 : i32
    return %arg0, %c0_i32, %arg1 : i32, i32, i32
  }
}

</mosaic_0001>

<llo_original>
// kernel: tpu_custom_call.1
$region0: #{tpu_custom_call.1}
  #allocation0 [shape = 'u32[]', space=smem, size = 0x4, offset = 0x4, fixed_abs, tag = 'smem constant byte address 0x4 - core index']
  #allocation1 [shape = 'u32[144,128]{1,0:T(1,128)}', space=vmem, size = 0x12000, scoped, tag = 'internal scratch']
  %s0 = inlined_call_operand.hbm [shape: f32[2,16,1], index: 0, kind: input, shape index: {}]
  %s1 = inlined_call_operand.hbm [shape: f32[2,8,128], index: 1, kind: input, shape index: {}]
  %s2 = inlined_call_operand.hbm [shape: f32[2,8,128], index: 2, kind: input, shape index: {}]
  %s3 = inlined_call_operand.hbm [shape: f32[2,8,128], index: 3, kind: input, shape index: {}]
  %s4 = inlined_call_operand.hbm [shape: f32[3,8,8], index: 4, kind: input, shape index: {}]
  %s5 = inlined_call_operand.hbm [shape: f32[8,1], index: 5, kind: input, shape index: {}]
  %s6 = inlined_call_operand.hbm [shape: f32[2,8,128], index: 6, kind: output, shape index: {}]
  %s7 = sld [smem:[#allocation0]]
  $region81: #{tpu_custom_call.1} parent=0
    _
  %s9 = ssub.s32 1, %s7
  %s10 = scalar_select 0, %s9, %s7
  $region1: #{tpu_custom_call.1} parent=0
    #allocation2 [shape = 'u8[16384]{0}', space=vmem, size = 0x4000, scoped, tag = 'input window, operand 0']
    #allocation3 [shape = 's32[2]{0}', space=sflag, size = 0x8, scoped, tag = 'scoped memory for tpu_custom_call.1']
    #allocation4 [shape = 's32[2]{0}', space=sflag, size = 0x8, scoped, tag = 'scoped memory for tpu_custom_call.1']
    #allocation5 [shape = 'u8[8192]{0}', space=vmem, size = 0x2000, scoped, tag = 'input window, operand 1']
    #allocation6 [shape = 's32[2]{0}', space=sflag, size = 0x8, scoped, tag = 'scoped memory for tpu_custom_call.1']
    #allocation7 [shape = 'u8[8192]{0}', space=vmem, size = 0x2000, scoped, tag = 'input window, operand 2']
    #allocation8 [shape = 'u8[8192]{0}', space=vmem, size = 0x2000, scoped, tag = 'input window, operand 3']
    #allocation9 [shape = 's32[2]{0}', space=sflag, size = 0x8, scoped, tag = 'scoped memory for tpu_custom_call.1']
    #allocation10 [shape = 'u8[12288]{0}', space=vmem, size = 0x3000, scoped, tag = 'input window, operand 4, single buffered']
    #allocation11 [shape = 'u8[4096]{0}', space=vmem, size = 0x1000, scoped, tag = 'input window, operand 5, single buffered']
    #allocation12 [shape = 's32[1]{0}', space=sflag, size = 0x4, scoped, tag = 'scoped memory for tpu_custom_call.1']
    #allocation13 [shape = 'u8[8192]{0}', space=vmem, size = 0x2000, scoped, tag = 'output window, operand 0']
    %11 = vsyncpa [#allocation3], 0
    %s12 = scalar_lea.sflag [#allocation3], 1
    %13 = vsyncpa %s12, 0
    %14 = vsyncpa [#allocation6], 0
    %s15 = scalar_lea.sflag [#allocation6], 1
    %16 = vsyncpa %s15, 0
    %17 = vsyncpa [#allocation9], 0
    %s18 = scalar_lea.sflag [#allocation9], 1
    %19 = vsyncpa %s18, 0
    %20 = vsyncpa [#allocation12], 0
    %21 = vsyncpa [#allocation4], 0
    %s22 = scalar_lea.sflag [#allocation4], 1
    %23 = vsyncpa %s22, 0
    loop: start=0, step=1, limit=4
    $region2: #{tpu_custom_call.1} parent=1 // loop_pre_header
      _
    $region3: #{tpu_custom_call.1} parent=1 // loop_header
      %s25 = sphi 0, %s29
      %p26 = scmp.ge.s32.totalorder %s25, 4
      %s32 = sphi 0, %s44
      %s33 = sphi 0, %s40
      %s34 = sphi 0, %s32
      %s35 = sphi 0, %s33
      %s36 = sphi 0, %s34
      %s37 = sphi 0, %s35
      %s47 = sphi 0, %s49
      %s50 = sphi 0, %s47
      %s51 = sphi 0, %s50
      %s67 = sphi 0, %s51
      %s75 = sphi 0, %s77
      %s78 = sphi 0, %s75
      %s79 = sphi 0, %s78
      %s95 = sphi 0, %s79
      %s109 = sphi 0, %s111
      %s112 = sphi 0, %s109
      %s113 = sphi 0, %s112
      %s129 = sphi 0, %s113
      %s143 = sphi 0, %s145
      %s146 = sphi 0, %s143
      %s147 = sphi 0, %s146
      %s163 = sphi 0, %s147
      %s167 = sphi 0, %s167
      %s169 = sphi 0, %s167
      %s170 = sphi 0, %s169
      %s184 = sphi 0, %s170
      %s188 = sphi 0, %s188
      %s190 = sphi 0, %s188
      %s191 = sphi 0, %s190
      %s205 = sphi 0, %s191
      %s213 = sphi 0, %s215
      %s216 = sphi 0, %s213
      %s217 = sphi 0, %s216
      %s233 = sphi 0, %s217
    $region4: #{tpu_custom_call.1} parent=1 // loop_header_branch
      %28 = sbr.rel (%p26) target = $region8
    $region5: #{tpu_custom_call.1} parent=1 // loop_body
      %s30 = ssub.s32 %s25, 1
      %s31 = ssub.s32 %s25, 2
      %s38 = sadd.s32 1, %s33
      %p39 = scmp.ge.s32.totalorder %s38, 1
      %s40 = scalar_select %p39, 0, %s38
      %s41 = sadd.s32 1, %s32
      %s42 = scalar_select %p39, %s41, %s32
      %p43 = scmp.ge.s32.totalorder %s42, 2
      %s44 = scalar_select %p43, 0, %s42
      %s45 = ssub.s32 %s32, %s44
      %p46 = scmp.eq.s32.totalorder %s45, 0
      %s48 = sadd.s32 %s47, 1
      %s49 = scalar_select %p46, %s47, %s48
      %p52 = pneg %p46
      %p53 = scmp.eq.s32.totalorder %s25, 1
      %p54 = por %p52, %p53
      %p55 = scmp.ne.s32.totalorder %s47, %s50
      %p56 = scmp.eq.s32.totalorder %s25, 0
      %p57 = por %p55, %p56
      %p58 = scmp.ne.s32.totalorder %s47, %s50
      %p59 = scmp.eq.s32.totalorder %s30, 1
      %p60 = por %p58, %p59
      %p61 = scmp.ne.s32.totalorder %s50, %s51
      %p62 = scmp.eq.s32.totalorder %s30, 0
      %p63 = por %p61, %p62
      %p64 = scmp.ne.s32.totalorder %s50, %s51
      %p65 = scmp.eq.s32.totalorder %s31, 1
      %p66 = por %p64, %p65
      %p68 = scmp.ne.s32.totalorder %s51, %s67
      %p69 = scmp.eq.s32.totalorder %s31, 0
      %p70 = por %p68, %p69
      %s71 = ssub.s32 %s32, %s44
      %s72 = ssub.s32 %s33, %s40
      %s73 = sor.u32 %s71, %s72
      %p74 = scmp.eq.s32.totalorder %s73, 0
      %s76 = sadd.s32 %s75, 1
      %s77 = scalar_select %p74, %s75, %s76
      %p80 = pneg %p74
      %p81 = scmp.eq.s32.totalorder %s25, 1
      %p82 = por %p80, %p81
      %p83 = scmp.ne.s32.totalorder %s75, %s78
      %p84 = scmp.eq.s32.totalorder %s25, 0
      %p85 = por %p83, %p84
      %p86 = scmp.ne.s32.totalorder %s75, %s78
      %p87 = scmp.eq.s32.totalorder %s30, 1
      %p88 = por %p86, %p87
      %p89 = scmp.ne.s32.totalorder %s78, %s79
      %p90 = scmp.eq.s32.totalorder %s30, 0
      %p91 = por %p89, %p90
      %p92 = scmp.ne.s32.totalorder %s78, %s79
      %p93 = scmp.eq.s32.totalorder %s31, 1
      %p94 = por %p92, %p93
      %p96 = scmp.ne.s32.totalorder %s79, %s95
      %p97 = scmp.eq.s32.totalorder %s31, 0
      %p98 = por %p96, %p97
      %s99 = ssub.s32 %s33, 1
      %p100 = scmp.gt.s32.totalorder %s99, 0
      %s101 = scalar_select %p100, %s99, 0
      %s102 = ssub.s32 %s40, 1
      %p103 = scmp.gt.s32.totalorder %s102, 0
      %s104 = scalar_select %p103, %s102, 0
      %s105 = ssub.s32 %s32, %s44
      %s106 = ssub.s32 %s101, %s104
      %s107 = sor.u32 %s105, %s106
      %p108 = scmp.eq.s32.totalorder %s107, 0
      %s110 = sadd.s32 %s109, 1
      %s111 = scalar_select %p108, %s109, %s110
      %p114 = pneg %p108
      %p115 = scmp.eq.s32.totalorder %s25, 1
      %p116 = por %p114, %p115
      %p117 = scmp.ne.s32.totalorder %s109, %s112
      %p118 = scmp.eq.s32.totalorder %s25, 0
      %p119 = por %p117, %p118
      %p120 = scmp.ne.s32.totalorder %s109, %s112
      %p121 = scmp.eq.s32.totalorder %s30, 1
      %p122 = por %p120, %p121
      %p123 = scmp.ne.s32.totalorder %s112, %s113
      %p124 = scmp.eq.s32.totalorder %s30, 0
      %p125 = por %p123, %p124
      %p126 = scmp.ne.s32.totalorder %s112, %s113
      %p127 = scmp.eq.s32.totalorder %s31, 1
      %p128 = por %p126, %p127
      %p130 = scmp.ne.s32.totalorder %s113, %s129
      %p131 = scmp.eq.s32.totalorder %s31, 0
      %p132 = por %p130, %p131
      %s133 = sadd.s32 %s33, 1
      %p134 = scmp.lt.s32.totalorder %s133, 0
      %s135 = scalar_select %p134, %s133, 0
      %s136 = sadd.s32 %s40, 1
      %p137 = scmp.lt.s32.totalorder %s136, 0
      %s138 = scalar_select %p137, %s136, 0
      %s139 = ssub.s32 %s32, %s44
      %s140 = ssub.s32 %s135, %s138
      %s141 = sor.u32 %s139, %s140
      %p142 = scmp.eq.s32.totalorder %s141, 0
      %s144 = sadd.s32 %s143, 1
      %s145 = scalar_select %p142, %s143, %s144
      %p148 = pneg %p142
      %p149 = scmp.eq.s32.totalorder %s25, 1
      %p150 = por %p148, %p149
      %p151 = scmp.ne.s32.totalorder %s143, %s146
      %p152 = scmp.eq.s32.totalorder %s25, 0
      %p153 = por %p151, %p152
      %p154 = scmp.ne.s32.totalorder %s143, %s146
      %p155 = scmp.eq.s32.totalorder %s30, 1
      %p156 = por %p154, %p155
      %p157 = scmp.ne.s32.totalorder %s146, %s147
      %p158 = scmp.eq.s32.totalorder %s30, 0
      %p159 = por %p157, %p158
      %p160 = scmp.ne.s32.totalorder %s146, %s147
      %p161 = scmp.eq.s32.totalorder %s31, 1
      %p162 = por %p160, %p161
      %p164 = scmp.ne.s32.totalorder %s147, %s163
      %p165 = scmp.eq.s32.totalorder %s31, 0
      %p166 = por %p164, %p165
      %s168 = sadd.s32 %s167, 1
      %p171 = scmp.eq.s32.totalorder %s25, 1
      %p172 = scmp.ne.s32.totalorder %s167, %s169
      %p173 = scmp.eq.s32.totalorder %s25, 0
      %p174 = por %p172, %p173
      %p175 = scmp.ne.s32.totalorder %s167, %s169
      %p176 = scmp.eq.s32.totalorder %s30, 1
      %p177 = por %p175, %p176
      %p178 = scmp.ne.s32.totalorder %s169, %s170
      %p179 = scmp.eq.s32.totalorder %s30, 0
      %p180 = por %p178, %p179
      %p181 = scmp.ne.s32.totalorder %s169, %s170
      %p182 = scmp.eq.s32.totalorder %s31, 1
      %p183 = por %p181, %p182
      %p185 = scmp.ne.s32.totalorder %s170, %s184
      %p186 = scmp.eq.s32.totalorder %s31, 0
      %p187 = por %p185, %p186
      %s189 = sadd.s32 %s188, 1
      %p192 = scmp.eq.s32.totalorder %s25, 1
      %p193 = scmp.ne.s32.totalorder %s188, %s190
      %p194 = scmp.eq.s32.totalorder %s25, 0
      %p195 = por %p193, %p194
      %p196 = scmp.ne.s32.totalorder %s188, %s190
      %p197 = scmp.eq.s32.totalorder %s30, 1
      %p198 = por %p196, %p197
      %p199 = scmp.ne.s32.totalorder %s190, %s191
      %p200 = scmp.eq.s32.totalorder %s30, 0
      %p201 = por %p199, %p200
      %p202 = scmp.ne.s32.totalorder %s190, %s191
      %p203 = scmp.eq.s32.totalorder %s31, 1
      %p204 = por %p202, %p203
      %p206 = scmp.ne.s32.totalorder %s191, %s205
      %p207 = scmp.eq.s32.totalorder %s31, 0
      %p208 = por %p206, %p207
      %s209 = ssub.s32 %s32, %s44
      %s210 = ssub.s32 %s33, %s40
      %s211 = sor.u32 %s209, %s210
      %p212 = scmp.eq.s32.totalorder %s211, 0
      %s214 = sadd.s32 %s213, 1
      %s215 = scalar_select %p212, %s213, %s214
      %p218 = pneg %p212
      %p219 = scmp.eq.s32.totalorder %s25, 1
      %p220 = por %p218, %p219
      %p221 = scmp.ne.s32.totalorder %s213, %s216
      %p222 = scmp.eq.s32.totalorder %s25, 0
      %p223 = por %p221, %p222
      %p224 = scmp.ne.s32.totalorder %s213, %s216
      %p225 = scmp.eq.s32.totalorder %s30, 1
      %p226 = por %p224, %p225
      %p227 = scmp.ne.s32.totalorder %s216, %s217
      %p228 = scmp.eq.s32.totalorder %s30, 0
      %p229 = por %p227, %p228
      %p230 = scmp.ne.s32.totalorder %s216, %s217
      %p231 = scmp.eq.s32.totalorder %s31, 1
      %p232 = por %p230, %p231
      %p234 = scmp.ne.s32.totalorder %s217, %s233
      %p235 = scmp.eq.s32.totalorder %s31, 0
      %p236 = por %p234, %p235
      %p237 = scmp.le.s32.totalorder 1, %s25
      %p238 = scmp.lt.s32.totalorder %s25, 3
      %p239 = pnand %p237, %p238
      %p240 = pneg %p239
      // Predicated region
      $region9: #{tpu_custom_call.1} parent=5 // pred_check
        _
      $region10: #{tpu_custom_call.1} parent=5 // pred_check_branch
        %242 = sbr.rel (%p239) target = $region12
      $region11: #{tpu_custom_call.1} parent=5 // pred_region
        %s243 = ssub.s32 %s25, 1
        // Predicated region
        $region13: #{tpu_custom_call.1} parent=11 // pred_check
          %p244 = pneg %p180
        $region14: #{tpu_custom_call.1} parent=11 // pred_check_branch
          %246 = sbr.rel (%p244) target = $region16
        $region15: #{tpu_custom_call.1} parent=11 // pred_region
          %s248 = ssub.s32 384, 384
          %249 = vsyncadd [#allocation9], %s248
          %s250 = sshll.u32 [#allocation10], 4
          %s251 = int_to_ptr.vmem [resolvable:$true] %s250
          %256 = dma.hbm_to_vmem [thread:$0]  %s4, 384, %s251, [#allocation9], 128, 128, 8
        $region16: #{tpu_custom_call.1} parent=11 // pred_fallthru
          _
        // Predicated region
        $region17: #{tpu_custom_call.1} parent=11 // pred_check
          %p257 = pneg %p201
        $region18: #{tpu_custom_call.1} parent=11 // pred_check_branch
          %259 = sbr.rel (%p257) target = $region20
        $region19: #{tpu_custom_call.1} parent=11 // pred_region
          %s261 = ssub.s32 128, 128
          %262 = vsyncadd [#allocation12], %s261
          %s264 = sshll.u32 [#allocation11], 4
          %s265 = int_to_ptr.vmem [resolvable:$true] %s264
          %267 = dma.hbm_to_vmem [thread:$0]  %s5, 128, %s265, [#allocation12]
        $region20: #{tpu_custom_call.1} parent=11 // pred_fallthru
          _
      $region12: #{tpu_custom_call.1} parent=5 // pred_fallthru
        _
      %p268 = scmp.lt.s32.totalorder %s25, 2
      // Predicated region
      $region21: #{tpu_custom_call.1} parent=5 // pred_check
        %p269 = pneg %p268
      $region22: #{tpu_custom_call.1} parent=5 // pred_check_branch
        %271 = sbr.rel (%p269) target = $region24
      $region23: #{tpu_custom_call.1} parent=5 // pred_region
        // Predicated region
        $region25: #{tpu_custom_call.1} parent=23 // pred_check
          %p272 = pneg %p57
        $region26: #{tpu_custom_call.1} parent=23 // pred_check_branch
          %274 = sbr.rel (%p272) target = $region28
        $region27: #{tpu_custom_call.1} parent=23 // pred_region
          %s275 = sand.u32 %s47, 1
          %s276 = scalar_lea.sflag [#allocation3], %s275
          %s277 = sand.u32 %s47, 1
          %s278 = smul.addr %s277, 16
          %s279 = scalar_lea.vmem [#allocation2], %s278
          %s281 = ssub.s32 256, 256
          %282 = vsyncadd %s276, %s281
          %s283 = smul.addr %s32, 2
          %s284 = smul.addr %s283, 128
          %s285 = scalar_lea.hbm %s0, %s284
          %s286 = sshll.u32 %s279, 4
          %s287 = int_to_ptr.vmem [resolvable:$true] %s286
          %292 = dma.hbm_to_vmem [thread:$0]  %s285, 256, %s287, %s276, 128, 128, 8
        $region28: #{tpu_custom_call.1} parent=23 // pred_fallthru
          _
        // Predicated region
        $region29: #{tpu_custom_call.1} parent=23 // pred_check
          %p293 = pneg %p85
        $region30: #{tpu_custom_call.1} parent=23 // pred_check_branch
          %295 = sbr.rel (%p293) target = $region32
        $region31: #{tpu_custom_call.1} parent=23 // pred_region
          %s296 = sand.u32 %s25, 1
          %s297 = scalar_lea.sflag [#allocation6], %s296
          %s298 = sand.u32 %s75, 1
          %s299 = smul.addr %s298, 8
          %s300 = scalar_lea.vmem [#allocation5], %s299
          %s302 = ssub.s32 128, 128
          %303 = vsyncadd %s297, %s302
          %s304 = sadd.s32 %s33, %s32
          %s305 = smul.addr %s304, 128
          %s306 = scalar_lea.hbm %s1, %s305
          %s308 = sshll.u32 %s300, 4
          %s309 = int_to_ptr.vmem [resolvable:$true] %s308
          %311 = dma.hbm_to_vmem [thread:$0]  %s306, 128, %s309, %s297
        $region32: #{tpu_custom_call.1} parent=23 // pred_fallthru
          _
        // Predicated region
        $region33: #{tpu_custom_call.1} parent=23 // pred_check
          %p312 = pneg %p119
        $region34: #{tpu_custom_call.1} parent=23 // pred_check_branch
          %314 = sbr.rel (%p312) target = $region36
        $region35: #{tpu_custom_call.1} parent=23 // pred_region
          %s315 = sand.u32 %s25, 1
          %s316 = scalar_lea.sflag [#allocation6], %s315
          %s317 = sand.u32 %s109, 1
          %s318 = smul.addr %s317, 8
          %s319 = scalar_lea.vmem [#allocation7], %s318
          %s320 = ssub.s32 %s33, 1
          %p321 = scmp.gt.s32.totalorder %s320, 0
          %s322 = scalar_select %p321, %s320, 0
          %s324 = ssub.s32 128, 128
          %325 = vsyncadd %s316, %s324
          %s326 = sadd.s32 %s322, %s32
          %s327 = smul.addr %s326, 128
          %s328 = scalar_lea.hbm %s2, %s327
          %s330 = sshll.u32 %s319, 4
          %s331 = int_to_ptr.vmem [resolvable:$true] %s330
          %333 = dma.hbm_to_vmem [thread:$0]  %s328, 128, %s331, %s316
        $region36: #{tpu_custom_call.1} parent=23 // pred_fallthru
          _
        // Predicated region
        $region37: #{tpu_custom_call.1} parent=23 // pred_check
          %p334 = pneg %p153
        $region38: #{tpu_custom_call.1} parent=23 // pred_check_branch
          %336 = sbr.rel (%p334) target = $region40
        $region39: #{tpu_custom_call.1} parent=23 // pred_region
          %s337 = sand.u32 %s25, 1
          %s338 = scalar_lea.sflag [#allocation9], %s337
          %s339 = sand.u32 %s143, 1
          %s340 = smul.addr %s339, 8
          %s341 = scalar_lea.vmem [#allocation8], %s340
          %s342 = sadd.s32 %s33, 1
          %p343 = scmp.lt.s32.totalorder %s342, 0
          %s344 = scalar_select %p343, %s342, 0
          %s346 = ssub.s32 128, 128
          %347 = vsyncadd %s338, %s346
          %s348 = sadd.s32 %s344, %s32
          %s349 = smul.addr %s348, 128
          %s350 = scalar_lea.hbm %s3, %s349
          %s352 = sshll.u32 %s341, 4
          %s353 = int_to_ptr.vmem [resolvable:$true] %s352
          %355 = dma.hbm_to_vmem [thread:$0]  %s350, 128, %s353, %s338
        $region40: #{tpu_custom_call.1} parent=23 // pred_fallthru
          _
      $region24: #{tpu_custom_call.1} parent=5 // pred_fallthru
        _
      %p356 = scmp.le.s32.totalorder 1, %s25
      %p357 = scmp.lt.s32.totalorder %s25, 3
      %p358 = pnand %p356, %p357
      %p359 = pneg %p358
      // Predicated region
      $region41: #{tpu_custom_call.1} parent=5 // pred_check
        _
      $region42: #{tpu_custom_call.1} parent=5 // pred_check_branch
        %361 = sbr.rel (%p358) target = $region44
      $region43: #{tpu_custom_call.1} parent=5 // pred_region
        %s362 = ssub.s32 %s25, 1
        %s363 = sand.u32 %s50, 1
        %s364 = scalar_lea.sflag [#allocation3], %s363
        %s365 = sand.u32 %s50, 1
        %s366 = smul.addr %s365, 16
        %s367 = scalar_lea.vmem [#allocation2], %s366
        // Predicated region
        $region45: #{tpu_custom_call.1} parent=43 // pred_check
          %p368 = pneg %p63
        $region46: #{tpu_custom_call.1} parent=43 // pred_check_branch
          %370 = sbr.rel (%p368) target = $region48
        $region47: #{tpu_custom_call.1} parent=43 // pred_region
          %371 = dma.done %s364, 256
        $region48: #{tpu_custom_call.1} parent=43 // pred_fallthru
          _
        %s372 = sand.u32 %s30, 1
        %s373 = scalar_lea.sflag [#allocation6], %s372
        %s374 = sand.u32 %s78, 1
        %s375 = smul.addr %s374, 8
        %s376 = scalar_lea.vmem [#allocation5], %s375
        // Predicated region
        $region49: #{tpu_custom_call.1} parent=43 // pred_check
          %p377 = pneg %p91
        $region50: #{tpu_custom_call.1} parent=43 // pred_check_branch
          %379 = sbr.rel (%p377) target = $region52
        $region51: #{tpu_custom_call.1} parent=43 // pred_region
          %380 = dma.done %s373, 128
        $region52: #{tpu_custom_call.1} parent=43 // pred_fallthru
          _
        %s381 = sand.u32 %s30, 1
        %s382 = scalar_lea.sflag [#allocation6], %s381
        %s383 = sand.u32 %s112, 1
        %s384 = smul.addr %s383, 8
        %s385 = scalar_lea.vmem [#allocation7], %s384
        // Predicated region
        $region53: #{tpu_custom_call.1} parent=43 // pred_check
          %p386 = pneg %p125
        $region54: #{tpu_custom_call.1} parent=43 // pred_check_branch
          %388 = sbr.rel (%p386) target = $region56
        $region55: #{tpu_custom_call.1} parent=43 // pred_region
          %389 = dma.done %s382, 128
        $region56: #{tpu_custom_call.1} parent=43 // pred_fallthru
          _
        %s390 = sand.u32 %s30, 1
        %s391 = scalar_lea.sflag [#allocation9], %s390
        %s392 = sand.u32 %s146, 1
        %s393 = smul.addr %s392, 8
        %s394 = scalar_lea.vmem [#allocation8], %s393
        // Predicated region
        $region57: #{tpu_custom_call.1} parent=43 // pred_check
          %p395 = pneg %p159
        $region58: #{tpu_custom_call.1} parent=43 // pred_check_branch
          %397 = sbr.rel (%p395) target = $region60
        $region59: #{tpu_custom_call.1} parent=43 // pred_region
          %398 = dma.done %s391, 128
        $region60: #{tpu_custom_call.1} parent=43 // pred_fallthru
          _
        // Predicated region
        $region61: #{tpu_custom_call.1} parent=43 // pred_check
          %p399 = pneg %p180
        $region62: #{tpu_custom_call.1} parent=43 // pred_check_branch
          %401 = sbr.rel (%p399) target = $region64
        $region63: #{tpu_custom_call.1} parent=43 // pred_region
          %402 = dma.done [#allocation9], 384
        $region64: #{tpu_custom_call.1} parent=43 // pred_fallthru
          _
        // Predicated region
        $region65: #{tpu_custom_call.1} parent=43 // pred_check
          %p403 = pneg %p201
        $region66: #{tpu_custom_call.1} parent=43 // pred_check_branch
          %405 = sbr.rel (%p403) target = $region68
        $region67: #{tpu_custom_call.1} parent=43 // pred_region
          %406 = dma.done [#allocation12], 128
        $region68: #{tpu_custom_call.1} parent=43 // pred_fallthru
          _
        %s407 = sand.u32 %s50, 1
        %s408 = scalar_lea.sflag [#allocation3], %s407
        %s409 = sand.u32 %s50, 1
        %s410 = smul.addr %s409, 16
        %s411 = scalar_lea.vmem [#allocation2], %s410
        %p412 = pneg %p63
        %p413 = pneg %p60
        %s414 = sand.u32 %s30, 1
        %s415 = scalar_lea.sflag [#allocation6], %s414
        %s416 = sand.u32 %s78, 1
        %s417 = smul.addr %s416, 8
        %s418 = scalar_lea.vmem [#allocation5], %s417
        %p419 = pneg %p91
        %p420 = pneg %p88
        %s421 = sand.u32 %s30, 1
        %s422 = scalar_lea.sflag [#allocation6], %s421
        %s423 = sand.u32 %s112, 1
        %s424 = smul.addr %s423, 8
        %s425 = scalar_lea.vmem [#allocation7], %s424
        %p426 = pneg %p125
        %p427 = pneg %p122
        %s428 = sand.u32 %s30, 1
        %s429 = scalar_lea.sflag [#allocation9], %s428
        %s430 = sand.u32 %s146, 1
        %s431 = smul.addr %s430, 8
        %s432 = scalar_lea.vmem [#allocation8], %s431
        %p433 = pneg %p159
        %p434 = pneg %p156
        %p435 = pneg %p180
        %p436 = pneg %p177
        %p437 = pneg %p201
        %p438 = pneg %p198
        %p439 = pneg %p229
        %p440 = pneg %p226
        %s441 = sand.u32 %s216, 1
        %s442 = scalar_lea.sflag [#allocation4], %s441
        %s443 = sand.u32 %s216, 1
        %s444 = smul.addr %s443, 8
        %s445 = scalar_lea.vmem [#allocation13], %s444
        %s446 = ssub.s32 %s35, 1
        %p447 = scmp.gt.s32.totalorder %s446, 0
        %s448 = scalar_select %p447, %s446, 0
        %s449 = sadd.s32 %s35, 1
        %p450 = scmp.lt.s32.totalorder %s449, 0
        %s451 = scalar_select %p450, %s449, 0
        %v452 = vlaneseq
        %v453 = vand.u32 %v452, 127
        %s454 = smul.u32 %s35, 128
        %v455 = vstv %s454
        %v456 = vadd.s32 %v453, %v455
        %vm457 = vcmp.ge.s32.totalorder %v456, 1
        %vm458 = vcmp.lt.s32.totalorder %v456, 99
        %v459 = vld [vmem:[%s367] sm:$0xff]
        %v460 = vld [vmem:[%s367 + $0x8] sm:$0xff]
        %v461 = vld [vmem:[%s376] sm:$0xff]
        %463 = vset.pattern.permute.xlu0 0
        %464 = vperm.xlu0 %463, %v459
        %v465 = vpop.permute.xlu0 %464
        %v467 = vmul.f32 %v461, %v465
        %469 = vset.pattern.permute.xlu0 0
        %470 = vperm.xlu0 %469, %v460
        %v471 = vpop.permute.xlu0 %470
        %v473 = vadd.f32 %v467, %v471
        %vm474 = vcmp.gt.f32.partialorder %v473, 0.0
        %v475 = vmul.f32 %v473, 0.2
        %v476 = vsel %vm474, %v473, %v475
        %v477 = vld [vmem:[%s385] sm:$0xff]
        %478 = vrot.lane.b32.xlu0 %v459, 127
        %v479 = vpop.permute.xlu0 %478
        %v481 = vmul.f32 %v477, %v479
        %482 = vrot.lane.b32.xlu0 %v460, 127
        %v483 = vpop.permute.xlu0 %482
        %v485 = vadd.f32 %v481, %v483
        %vm486 = vcmp.gt.f32.partialorder %v485, 0.0
        %v487 = vmul.f32 %v485, 0.2
        %v488 = vsel %vm486, %v485, %v487
        %v489 = vld [vmem:[%s394] sm:$0xff]
        %v490 = vmul.f32 %v489, %v459
        %v491 = vadd.f32 %v490, %v460
        %vm492 = vcmp.gt.f32.partialorder %v491, 0.0
        %v493 = vmul.f32 %v491, 0.2
        %v494 = vsel %vm492, %v491, %v493
        %s495 = scalar_lea.vmem [#allocation10], 8
        %v496 = vld [vmem:[%s495] sm:$0xff]
        %v497 = vld [vmem:[#allocation10] sm:$0xff]
        %vm498 = vcmask 64512
        %v500 = vsel %vm498, %v497, 0
        %502 = vmatprep.subr.mxu0 0.0
        %503 = vmatpush1.msra.mxu0 %v476
        %504 = vmatprep.subr.mxu0 0.0
        %505 = vmatpush1.msra.mxu0 0.0
        %506 = vmatprep.subr.mxu0 0.0
        %507 = vmatpush1.msra.mxu0 0.0
        %508 = vmatprep.subr.mxu0 0.0
        %509 = vmatpush1.msra.mxu0 0.0
        %510 = vmatprep.subr.mxu0 0.0
        %511 = vmatpush1.msra.mxu0 0.0
        %512 = vmatprep.subr.mxu0 0.0
        %513 = vmatpush1.msra.mxu0 0.0
        %514 = vmatprep.subr.mxu0 0.0
        %515 = vmatpush1.msra.mxu0 0.0
        %516 = vmatprep.subr.mxu0 0.0
        %517 = vmatpush1.msra.mxu0 0.0
        %518 = vmatprep.subr.mxu0 0.0
        %519 = vmatpush1.msra.mxu0 0.0
        %520 = vmatprep.subr.mxu0 0.0
        %521 = vmatpush1.msra.mxu0 0.0
        %522 = vmatprep.subr.mxu0 0.0
        %523 = vmatpush1.msra.mxu0 0.0
        %524 = vmatprep.subr.mxu0 0.0
        %525 = vmatpush1.msra.mxu0 0.0
        %526 = vmatprep.subr.mxu0 0.0
        %527 = vmatpush1.msra.mxu0 0.0
        %528 = vmatprep.subr.mxu0 0.0
        %529 = vmatpush1.msra.mxu0 0.0
        %530 = vmatprep.subr.mxu0 0.0
        %531 = vmatpush1.msra.mxu0 0.0
        %532 = vmatprep.subr.mxu0 0.0
        %533 = vmatpush1.msra.mxu0 0.0
        %534 = vmatprep.subr.mxu0 0.0
        %535 = vmatpush1.msra.mxu0 0.0
        %536 = vmatprep.subr.mxu0 0.0
        %537 = vmatpush1.msra.mxu0 0.0
        %538 = vmatprep.subr.mxu0 0.0
        %539 = vmatpush1.msra.mxu0 0.0
        %540 = vmatprep.subr.mxu0 0.0
        %541 = vmatpush1.msra.mxu0 0.0
        %542 = vmatprep.subr.mxu0 0.0
        %543 = vmatpush1.msra.mxu0 0.0
        %544 = vmatprep.subr.mxu0 0.0
        %545 = vmatpush1.msra.mxu0 0.0
        %546 = vmatprep.subr.mxu0 0.0
        %547 = vmatpush1.msra.mxu0 0.0
        %548 = vmatprep.subr.mxu0 0.0
        %549 = vmatpush1.msra.mxu0 0.0
        %550 = vmatprep.subr.mxu0 0.0
        %551 = vmatpush1.msra.mxu0 0.0
        %552 = vmatprep.subr.mxu0 0.0
        %553 = vmatpush1.msra.mxu0 0.0
        %554 = vmatprep.subr.mxu0 0.0
        %555 = vmatpush1.msra.mxu0 0.0
        %556 = vmatprep.subr.mxu0 0.0
        %557 = vmatpush1.msra.mxu0 0.0
        %558 = vmatprep.subr.mxu0 0.0
        %559 = vmatpush1.msra.mxu0 0.0
        %560 = vmatprep.subr.mxu0 0.0
        %561 = vmatpush1.msra.mxu0 0.0
        %562 = vmatprep.subr.mxu0 0.0
        %563 = vmatpush1.msra.mxu0 0.0
        %564 = vmatprep.subr.mxu0 0.0
        %565 = vmatpush1.msra.mxu0 0.0
        %566 = vmatprep.mubr.f32.mxu0 0.0
        %567 = vmatmul.mubr.f32.gmra.mrb[0].mxu0 %v500
        %v568 = vpop.f32.mrb[0].mxu0
        %v569 = vadd.f32 0.0, %v568
        %v570 = vpop.f32.mrb[0].mxu0
        %571 = vdwg.mxu0
        %s572 = scalar_lea.vmem [#allocation10], 16
        %v573 = vld [vmem:[%s572] sm:$0xff]
        %v575 = vsel %vm498, %v573, 0
        %577 = vmatprep.subr.mxu0 0.0
        %578 = vmatpush1.msra.mxu0 %v476
        %579 = vmatprep.subr.mxu0 0.0
        %580 = vmatpush1.msra.mxu0 0.0
        %581 = vmatprep.subr.mxu0 0.0
        %582 = vmatpush1.msra.mxu0 0.0
        %583 = vmatprep.subr.mxu0 0.0
        %584 = vmatpush1.msra.mxu0 0.0
        %585 = vmatprep.subr.mxu0 0.0
        %586 = vmatpush1.msra.mxu0 0.0
        %587 = vmatprep.subr.mxu0 0.0
        %588 = vmatpush1.msra.mxu0 0.0
        %589 = vmatprep.subr.mxu0 0.0
        %590 = vmatpush1.msra.mxu0 0.0
        %591 = vmatprep.subr.mxu0 0.0
        %592 = vmatpush1.msra.mxu0 0.0
        %593 = vmatprep.subr.mxu0 0.0
        %594 = vmatpush1.msra.mxu0 0.0
        %595 = vmatprep.subr.mxu0 0.0
        %596 = vmatpush1.msra.mxu0 0.0
        %597 = vmatprep.subr.mxu0 0.0
        %598 = vmatpush1.msra.mxu0 0.0
        %599 = vmatprep.subr.mxu0 0.0
        %600 = vmatpush1.msra.mxu0 0.0
        %601 = vmatprep.subr.mxu0 0.0
        %602 = vmatpush1.msra.mxu0 0.0
        %603 = vmatprep.subr.mxu0 0.0
        %604 = vmatpush1.msra.mxu0 0.0
        %605 = vmatprep.subr.mxu0 0.0
        %606 = vmatpush1.msra.mxu0 0.0
        %607 = vmatprep.subr.mxu0 0.0
        %608 = vmatpush1.msra.mxu0 0.0
        %609 = vmatprep.subr.mxu0 0.0
        %610 = vmatpush1.msra.mxu0 0.0
        %611 = vmatprep.subr.mxu0 0.0
        %612 = vmatpush1.msra.mxu0 0.0
        %613 = vmatprep.subr.mxu0 0.0
        %614 = vmatpush1.msra.mxu0 0.0
        %615 = vmatprep.subr.mxu0 0.0
        %616 = vmatpush1.msra.mxu0 0.0
        %617 = vmatprep.subr.mxu0 0.0
        %618 = vmatpush1.msra.mxu0 0.0
        %619 = vmatprep.subr.mxu0 0.0
        %620 = vmatpush1.msra.mxu0 0.0
        %621 = vmatprep.subr.mxu0 0.0
        %622 = vmatpush1.msra.mxu0 0.0
        %623 = vmatprep.subr.mxu0 0.0
        %624 = vmatpush1.msra.mxu0 0.0
        %625 = vmatprep.subr.mxu0 0.0
        %626 = vmatpush1.msra.mxu0 0.0
        %627 = vmatprep.subr.mxu0 0.0
        %628 = vmatpush1.msra.mxu0 0.0
        %629 = vmatprep.subr.mxu0 0.0
        %630 = vmatpush1.msra.mxu0 0.0
        %631 = vmatprep.subr.mxu0 0.0
        %632 = vmatpush1.msra.mxu0 0.0
        %633 = vmatprep.subr.mxu0 0.0
        %634 = vmatpush1.msra.mxu0 0.0
        %635 = vmatprep.subr.mxu0 0.0
        %636 = vmatpush1.msra.mxu0 0.0
        %637 = vmatprep.subr.mxu0 0.0
        %638 = vmatpush1.msra.mxu0 0.0
        %639 = vmatprep.subr.mxu0 0.0
        %640 = vmatpush1.msra.mxu0 0.0
        %641 = vmatprep.mubr.f32.mxu0 0.0
        %642 = vmatmul.mubr.f32.gmra.mrb[0].mxu0 %v575
        %v643 = vpop.f32.mrb[0].mxu0
        %v644 = vadd.f32 0.0, %v643
        %v645 = vpop.f32.mrb[0].mxu0
        %646 = vdwg.mxu0
        %648 = vrot.lane.b32.xlu0 %v488, 1
        %v649 = vpop.permute.xlu0 %648
        %651 = vmatprep.subr.mxu0 0.0
        %652 = vmatpush1.msra.mxu0 %v649
        %653 = vmatprep.subr.mxu0 0.0
        %654 = vmatpush1.msra.mxu0 0.0
        %655 = vmatprep.subr.mxu0 0.0
        %656 = vmatpush1.msra.mxu0 0.0
        %657 = vmatprep.subr.mxu0 0.0
        %658 = vmatpush1.msra.mxu0 0.0
        %659 = vmatprep.subr.mxu0 0.0
        %660 = vmatpush1.msra.mxu0 0.0
        %661 = vmatprep.subr.mxu0 0.0
        %662 = vmatpush1.msra.mxu0 0.0
        %663 = vmatprep.subr.mxu0 0.0
        %664 = vmatpush1.msra.mxu0 0.0
        %665 = vmatprep.subr.mxu0 0.0
        %666 = vmatpush1.msra.mxu0 0.0
        %667 = vmatprep.subr.mxu0 0.0
        %668 = vmatpush1.msra.mxu0 0.0
        %669 = vmatprep.subr.mxu0 0.0
        %670 = vmatpush1.msra.mxu0 0.0
        %671 = vmatprep.subr.mxu0 0.0
        %672 = vmatpush1.msra.mxu0 0.0
        %673 = vmatprep.subr.mxu0 0.0
        %674 = vmatpush1.msra.mxu0 0.0
        %675 = vmatprep.subr.mxu0 0.0
        %676 = vmatpush1.msra.mxu0 0.0
        %677 = vmatprep.subr.mxu0 0.0
        %678 = vmatpush1.msra.mxu0 0.0
        %679 = vmatprep.subr.mxu0 0.0
        %680 = vmatpush1.msra.mxu0 0.0
        %681 = vmatprep.subr.mxu0 0.0
        %682 = vmatpush1.msra.mxu0 0.0
        %683 = vmatprep.subr.mxu0 0.0
        %684 = vmatpush1.msra.mxu0 0.0
        %685 = vmatprep.subr.mxu0 0.0
        %686 = vmatpush1.msra.mxu0 0.0
        %687 = vmatprep.subr.mxu0 0.0
        %688 = vmatpush1.msra.mxu0 0.0
        %689 = vmatprep.subr.mxu0 0.0
        %690 = vmatpush1.msra.mxu0 0.0
        %691 = vmatprep.subr.mxu0 0.0
        %692 = vmatpush1.msra.mxu0 0.0
        %693 = vmatprep.subr.mxu0 0.0
        %694 = vmatpush1.msra.mxu0 0.0
        %695 = vmatprep.subr.mxu0 0.0
        %696 = vmatpush1.msra.mxu0 0.0
        %697 = vmatprep.subr.mxu0 0.0
        %698 = vmatpush1.msra.mxu0 0.0
        %699 = vmatprep.subr.mxu0 0.0
        %700 = vmatpush1.msra.mxu0 0.0
        %701 = vmatprep.subr.mxu0 0.0
        %702 = vmatpush1.msra.mxu0 0.0
        %703 = vmatprep.subr.mxu0 0.0
        %704 = vmatpush1.msra.mxu0 0.0
        %705 = vmatprep.subr.mxu0 0.0
        %706 = vmatpush1.msra.mxu0 0.0
        %707 = vmatprep.subr.mxu0 0.0
        %708 = vmatpush1.msra.mxu0 0.0
        %709 = vmatprep.subr.mxu0 0.0
        %710 = vmatpush1.msra.mxu0 0.0
        %711 = vmatprep.subr.mxu0 0.0
        %712 = vmatpush1.msra.mxu0 0.0
        %713 = vmatprep.subr.mxu0 0.0
        %714 = vmatpush1.msra.mxu0 0.0
        %715 = vmatprep.mubr.f32.mxu0 0.0
        %716 = vmatmul.mubr.f32.gmra.mrb[0].mxu0 %v500
        %v717 = vpop.f32.mrb[0].mxu0
        %v718 = vadd.f32 0.0, %v717
        %v719 = vpop.f32.mrb[0].mxu0
        %720 = vdwg.mxu0
        %721 = vmatprep.subr.mxu0 0.0
        %722 = vmatpush1.msra.mxu0 %v494
        %723 = vmatprep.subr.mxu0 0.0
        %724 = vmatpush1.msra.mxu0 0.0
        %725 = vmatprep.subr.mxu0 0.0
        %726 = vmatpush1.msra.mxu0 0.0
        %727 = vmatprep.subr.mxu0 0.0
        %728 = vmatpush1.msra.mxu0 0.0
        %729 = vmatprep.subr.mxu0 0.0
        %730 = vmatpush1.msra.mxu0 0.0
        %731 = vmatprep.subr.mxu0 0.0
        %732 = vmatpush1.msra.mxu0 0.0
        %733 = vmatprep.subr.mxu0 0.0
        %734 = vmatpush1.msra.mxu0 0.0
        %735 = vmatprep.subr.mxu0 0.0
        %736 = vmatpush1.msra.mxu0 0.0
        %737 = vmatprep.subr.mxu0 0.0
        %738 = vmatpush1.msra.mxu0 0.0
        %739 = vmatprep.subr.mxu0 0.0
        %740 = vmatpush1.msra.mxu0 0.0
        %741 = vmatprep.subr.mxu0 0.0
        %742 = vmatpush1.msra.mxu0 0.0
        %743 = vmatprep.subr.mxu0 0.0
        %744 = vmatpush1.msra.mxu0 0.0
        %745 = vmatprep.subr.mxu0 0.0
        %746 = vmatpush1.msra.mxu0 0.0
        %747 = vmatprep.subr.mxu0 0.0
        %748 = vmatpush1.msra.mxu0 0.0
        %749 = vmatprep.subr.mxu0 0.0
        %750 = vmatpush1.msra.mxu0 0.0
        %751 = vmatprep.subr.mxu0 0.0
        %752 = vmatpush1.msra.mxu0 0.0
        %753 = vmatprep.subr.mxu0 0.0
        %754 = vmatpush1.msra.mxu0 0.0
        %755 = vmatprep.subr.mxu0 0.0
        %756 = vmatpush1.msra.mxu0 0.0
        %757 = vmatprep.subr.mxu0 0.0
        %758 = vmatpush1.msra.mxu0 0.0
        %759 = vmatprep.subr.mxu0 0.0
        %760 = vmatpush1.msra.mxu0 0.0
        %761 = vmatprep.subr.mxu0 0.0
        %762 = vmatpush1.msra.mxu0 0.0
        %763 = vmatprep.subr.mxu0 0.0
        %764 = vmatpush1.msra.mxu0 0.0
        %765 = vmatprep.subr.mxu0 0.0
        %766 = vmatpush1.msra.mxu0 0.0
        %767 = vmatprep.subr.mxu0 0.0
        %768 = vmatpush1.msra.mxu0 0.0
        %769 = vmatprep.subr.mxu0 0.0
        %770 = vmatpush1.msra.mxu0 0.0
        %771 = vmatprep.subr.mxu0 0.0
        %772 = vmatpush1.msra.mxu0 0.0
        %773 = vmatprep.subr.mxu0 0.0
        %774 = vmatpush1.msra.mxu0 0.0
        %775 = vmatprep.subr.mxu0 0.0
        %776 = vmatpush1.msra.mxu0 0.0
        %777 = vmatprep.subr.mxu0 0.0
        %778 = vmatpush1.msra.mxu0 0.0
        %779 = vmatprep.subr.mxu0 0.0
        %780 = vmatpush1.msra.mxu0 0.0
        %781 = vmatprep.subr.mxu0 0.0
        %782 = vmatpush1.msra.mxu0 0.0
        %783 = vmatprep.subr.mxu0 0.0
        %784 = vmatpush1.msra.mxu0 0.0
        %785 = vmatprep.mubr.f32.mxu0 0.0
        %786 = vmatmul.mubr.f32.gmra.mrb[0].mxu0 %v575
        %v787 = vpop.f32.mrb[0].mxu0
        %v788 = vadd.f32 0.0, %v787
        %v789 = vpop.f32.mrb[0].mxu0
        %790 = vdwg.mxu0
        %792 = vrot.lane.b32.xlu0 %v569, 1
        %v793 = vpop.permute.xlu0 %792
        %vm795 = vcmask 7168
        %v796 = vsel %vm795, %v718, %v793
        %798 = vrot.lane.b32.xlu0 %v644, 127
        %v799 = vpop.permute.xlu0 %798
        %802 = vrot.lane.b32.xlu0 %v788, 127
        %v803 = vpop.permute.xlu0 %802
        %vm805 = vcmask 1039360
        %v806 = vsel %vm805, %v799, %v803
        %v807 = vsel %vm457, 1, 0
        %vm808 = vcmp.eq.s32.totalorder %v807, 1
        %v809 = vsel %vm808, %v796, 0.0
        %v811 = vsel %vm498, %v496, 0
        %813 = vmatprep.subr.mxu0 0.0
        %814 = vmatpush1.msra.mxu0 %v476
        %815 = vmatprep.subr.mxu0 0.0
        %816 = vmatpush1.msra.mxu0 0.0
        %817 = vmatprep.subr.mxu0 0.0
        %818 = vmatpush1.msra.mxu0 0.0
        %819 = vmatprep.subr.mxu0 0.0
        %820 = vmatpush1.msra.mxu0 0.0
        %821 = vmatprep.subr.mxu0 0.0
        %822 = vmatpush1.msra.mxu0 0.0
        %823 = vmatprep.subr.mxu0 0.0
        %824 = vmatpush1.msra.mxu0 0.0
        %825 = vmatprep.subr.mxu0 0.0
        %826 = vmatpush1.msra.mxu0 0.0
        %827 = vmatprep.subr.mxu0 0.0
        %828 = vmatpush1.msra.mxu0 0.0
        %829 = vmatprep.subr.mxu0 0.0
        %830 = vmatpush1.msra.mxu0 0.0
        %831 = vmatprep.subr.mxu0 0.0
        %832 = vmatpush1.msra.mxu0 0.0
        %833 = vmatprep.subr.mxu0 0.0
        %834 = vmatpush1.msra.mxu0 0.0
        %835 = vmatprep.subr.mxu0 0.0
        %836 = vmatpush1.msra.mxu0 0.0
        %837 = vmatprep.subr.mxu0 0.0
        %838 = vmatpush1.msra.mxu0 0.0
        %839 = vmatprep.subr.mxu0 0.0
        %840 = vmatpush1.msra.mxu0 0.0
        %841 = vmatprep.subr.mxu0 0.0
        %842 = vmatpush1.msra.mxu0 0.0
        %843 = vmatprep.subr.mxu0 0.0
        %844 = vmatpush1.msra.mxu0 0.0
        %845 = vmatprep.subr.mxu0 0.0
        %846 = vmatpush1.msra.mxu0 0.0
        %847 = vmatprep.subr.mxu0 0.0
        %848 = vmatpush1.msra.mxu0 0.0
        %849 = vmatprep.subr.mxu0 0.0
        %850 = vmatpush1.msra.mxu0 0.0
        %851 = vmatprep.subr.mxu0 0.0
        %852 = vmatpush1.msra.mxu0 0.0
        %853 = vmatprep.subr.mxu0 0.0
        %854 = vmatpush1.msra.mxu0 0.0
        %855 = vmatprep.subr.mxu0 0.0
        %856 = vmatpush1.msra.mxu0 0.0
        %857 = vmatprep.subr.mxu0 0.0
        %858 = vmatpush1.msra.mxu0 0.0
        %859 = vmatprep.subr.mxu0 0.0
        %860 = vmatpush1.msra.mxu0 0.0
        %861 = vmatprep.subr.mxu0 0.0
        %862 = vmatpush1.msra.mxu0 0.0
        %863 = vmatprep.subr.mxu0 0.0
        %864 = vmatpush1.msra.mxu0 0.0
        %865 = vmatprep.subr.mxu0 0.0
        %866 = vmatpush1.msra.mxu0 0.0
        %867 = vmatprep.subr.mxu0 0.0
        %868 = vmatpush1.msra.mxu0 0.0
        %869 = vmatprep.subr.mxu0 0.0
        %870 = vmatpush1.msra.mxu0 0.0
        %871 = vmatprep.subr.mxu0 0.0
        %872 = vmatpush1.msra.mxu0 0.0
        %873 = vmatprep.subr.mxu0 0.0
        %874 = vmatpush1.msra.mxu0 0.0
        %875 = vmatprep.subr.mxu0 0.0
        %876 = vmatpush1.msra.mxu0 0.0
        %877 = vmatprep.mubr.f32.mxu0 0.0
        %878 = vmatmul.mubr.f32.gmra.mrb[0].mxu0 %v811
        %v879 = vpop.f32.mrb[0].mxu0
        %v880 = vadd.f32 %v809, %v879
        %v881 = vpop.f32.mrb[0].mxu0
        %882 = vdwg.mxu0
        %v883 = vsel %vm458, 1, 0
        %vm884 = vcmp.eq.s32.totalorder %v883, 1
        %v885 = vsel %vm884, %v806, 0.0
        %v886 = vadd.f32 %v880, %v885
        %v887 = vld [vmem:[#allocation11] sm:$0xff]
        %889 = vset.pattern.permute.xlu0 0
        %890 = vperm.xlu0 %889, %v887
        %v891 = vpop.permute.xlu0 %890
        %v893 = vadd.f32 %v886, %v891
        %894 = vst [vmem:[%s445] sm:$0xff] %v893
        %s895 = sand.u32 %s216, 1
        %s896 = scalar_lea.sflag [#allocation4], %s895
        %s897 = sand.u32 %s216, 1
        %s898 = smul.addr %s897, 8
        %s899 = scalar_lea.vmem [#allocation13], %s898
        // Predicated region
        $region69: #{tpu_custom_call.1} parent=43 // pred_check
          %p900 = pneg %p226
        $region70: #{tpu_custom_call.1} parent=43 // pred_check_branch
          %902 = sbr.rel (%p900) target = $region72
        $region71: #{tpu_custom_call.1} parent=43 // pred_region
          %s904 = ssub.s32 128, 128
          %905 = vsyncadd %s896, %s904
          %s906 = sadd.s32 %s35, %s34
          %s907 = smul.addr %s906, 128
          %s908 = scalar_lea.hbm %s6, %s907
          %s910 = sshll.u32 %s899, 4
          %s911 = int_to_ptr.vmem [resolvable:$true] %s910
          %913 = dma.vmem_to_hbm [thread:$0]  %s911, 128, %s908, %s896
        $region72: #{tpu_custom_call.1} parent=43 // pred_fallthru
          _
      $region44: #{tpu_custom_call.1} parent=5 // pred_fallthru
        _
      %p914 = scmp.le.s32.totalorder 2, %s25
      // Predicated region
      $region73: #{tpu_custom_call.1} parent=5 // pred_check
        %p915 = pneg %p914
      $region74: #{tpu_custom_call.1} parent=5 // pred_check_branch
        %917 = sbr.rel (%p915) target = $region76
      $region75: #{tpu_custom_call.1} parent=5 // pred_region
        %s918 = ssub.s32 %s25, 2
        // Predicated region
        $region77: #{tpu_custom_call.1} parent=75 // pred_check
          %p919 = pneg %p232
        $region78: #{tpu_custom_call.1} parent=75 // pred_check_branch
          %921 = sbr.rel (%p919) target = $region80
        $region79: #{tpu_custom_call.1} parent=75 // pred_region
          %s922 = sand.u32 %s217, 1
          %s923 = scalar_lea.sflag [#allocation4], %s922
          %s924 = sand.u32 %s217, 1
          %s925 = smul.addr %s924, 8
          %s926 = scalar_lea.vmem [#allocation13], %s925
          %927 = dma.done %s923, 128
        $region80: #{tpu_custom_call.1} parent=75 // pred_fallthru
          _
      $region76: #{tpu_custom_call.1} parent=5 // pred_fallthru
        _
    $region6: #{tpu_custom_call.1} parent=1 // loop_footer
      %s29 = sadd.s32 1, %s25
    $region7: #{tpu_custom_call.1} parent=1 // loop_footer_branch
      %24 = sbr.rel target = $region3
    $region8: #{tpu_custom_call.1} parent=1 // loop_exit
      _
    %928 = vsyncpa [#allocation3], 1
    %s929 = scalar_lea.sflag [#allocation3], 1
    %930 = vsyncpa %s929, 1
    %931 = vsyncpa [#allocation6], 1
    %s932 = scalar_lea.sflag [#allocation6], 1
    %933 = vsyncpa %s932, 1
    %934 = vsyncpa [#allocation9], 1
    %s935 = scalar_lea.sflag [#allocation9], 1
    %936 = vsyncpa %s935, 1
    %937 = vsyncpa [#allocation12], 1
    %938 = vsyncpa [#allocation4], 1
    %s939 = scalar_lea.sflag [#allocation4], 1
    %940 = vsyncpa %s939, 1

</llo_original>
